<compile_context>
chip_gen: v5e
topology: v5e:2x2
jax: 0.10.0
libtpu: 0.0.40
codegen_flags: <defaults>
</compile_context>

<pallas_src>
import functools

import jax
import jax.numpy as jnp
from jax.experimental import pallas as pl
from jax.experimental.pallas import tpu as pltpu


def _round_up(v, m):
    return ((v + m - 1) // m) * m


def _fast_rcnn_heads_kernel(x_ref, wc_ref, bc_ref, wb_ref, bb_ref,
                            scores_ref, deltas_ref):
    """One row tile: load x once from VMEM, run both small GEMM heads.

    x_ref:      (TM, D)    row tile of flattened features (native dtype)
    wc_ref:     (D, K+1)   cls weight   (resident across the grid)
    bc_ref:     (1, K+1)   cls bias     (resident)
    wb_ref:     (D, RB)    bbox weight  (resident)
    bb_ref:     (1, RB)    bbox bias    (resident)
    scores_ref: (TM, K+1)  classification logits (fp32)
    deltas_ref: (TM, RB)   box regression deltas (fp32)
    """
    x = x_ref[...]
    scores_ref[...] = (
        jnp.dot(x, wc_ref[...], preferred_element_type=jnp.float32) + bc_ref[...]
    ).astype(scores_ref.dtype)
    deltas_ref[...] = (
        jnp.dot(x, wb_ref[...], preferred_element_type=jnp.float32) + bb_ref[...]
    ).astype(deltas_ref.dtype)


def prepare_fast_rcnn_params(w_cls, b_cls, w_box, b_box,
                             weight_dtype=jnp.bfloat16):
    """One-time parameter prep (hoisted out of the per-call forward).

    Weights are stored transposed relative to torch's Linear: (D, out).
    bf16 weights are MXU-native and pair with bf16 feature streaming; pass
    weight_dtype=jnp.float32 to keep full-precision weights.
    """
    return (jnp.asarray(w_cls, weight_dtype),
            jnp.asarray(b_cls, jnp.float32).reshape(1, -1),
            jnp.asarray(w_box, weight_dtype),
            jnp.asarray(b_box, jnp.float32).reshape(1, -1))


def _choose_row_tile(n, d, x_itemsize, out_cols):
    """Pick the row-tile size TM (multiple of 8)."""
    n8 = _round_up(max(n, 1), 8)
    # Target ~8 grid steps (>= 4 per TensorCore on dual-TC v7x), but never
    # bother with tiles under 128 rows (per-grid-step overhead ~0.35 us).
    tm = max(128, _round_up(pl.cdiv(n8, 8), 8))
    # VMEM budget for the double-buffered x tile + output tiles (~24 MiB keeps
    # the whole kernel comfortably inside v7x's 64 MiB physical VMEM).
    budget = 24 * 1024 * 1024
    per_row = 2 * (d * x_itemsize + out_cols * 4)
    tm_cap = max(8, (budget // per_row) // 8 * 8)
    tm = min(tm, tm_cap, 4096, n8)
    return max(8, (tm // 8) * 8)


@functools.partial(jax.jit, static_argnames=("tm",))
def fast_rcnn_output_layers_forward(x, w_cls, b_cls, w_box, b_box, *, tm=None):
    """Pallas implementation of FastRCNNOutputLayers.forward.

    Args:
      x:     (N, C, H, W) or (N, D) features, streamed in their native dtype
             (bf16 recommended: it halves the dominant HBM stream).
      w_cls: (D, num_classes + 1)                 (from prepare_fast_rcnn_params)
      b_cls: (1, num_classes + 1) float32
      w_box: (D, num_bbox_reg_classes * box_dim)
      b_box: (1, num_bbox_reg_classes * box_dim) float32
      tm:    optional row-tile override.

    Returns:
      scores:          (N, num_classes + 1)                float32
      proposal_deltas: (N, num_bbox_reg_classes * box_dim) float32
    """
    if x.ndim > 2:
        x = x.reshape(x.shape[0], -1)      # torch.flatten(x, start_dim=1)
    b_cls = jnp.asarray(b_cls, jnp.float32).reshape(1, -1)   # no-op if prepared
    b_box = jnp.asarray(b_box, jnp.float32).reshape(1, -1)

    N, D = x.shape
    Kp1 = w_cls.shape[1]
    RB = w_box.shape[1]
    out_cols = Kp1 + RB

    TM = tm if tm is not None else _choose_row_tile(N, D, x.dtype.itemsize, out_cols)
    TM = max(8, (min(TM, _round_up(N, 8)) // 8) * 8)
    grid = (pl.cdiv(N, TM),)               # last tile may be partial (masked)

    # Actual double-buffered VMEM footprint -> scoped limit (never below need).
    need = (2 * TM * D * x.dtype.itemsize               # x tile (2 buffers)
            + 2 * D * Kp1 * w_cls.dtype.itemsize        # cls weight
            + 2 * D * RB * w_box.dtype.itemsize         # box weight
            + 2 * TM * out_cols * 4                     # both output tiles
            + 4 * out_cols * 4)                         # bias rows
    vmem_limit = int(max(16 << 20, min(int(1.25 * need) + (2 << 20), 60 << 20)))

    cost = pl.CostEstimate(
        flops=2 * N * D * out_cols,
        transcendentals=0,
        bytes_accessed=int(N * D * x.dtype.itemsize
                           + D * Kp1 * w_cls.dtype.itemsize
                           + D * RB * w_box.dtype.itemsize
                           + N * out_cols * 4),
    )

    scores, proposal_deltas = pl.pallas_call(
        _fast_rcnn_heads_kernel,
        out_shape=(jax.ShapeDtypeStruct((N, Kp1), jnp.float32),
                   jax.ShapeDtypeStruct((N, RB), jnp.float32)),
        grid=grid,
        in_specs=[
            pl.BlockSpec((TM, D), lambda i: (i, 0)),     # x row tile (streamed)
            pl.BlockSpec((D, Kp1), lambda i: (0, 0)),    # cls weight (resident)
            pl.BlockSpec((1, Kp1), lambda i: (0, 0)),    # cls bias   (resident)
            pl.BlockSpec((D, RB), lambda i: (0, 0)),     # box weight (resident)
            pl.BlockSpec((1, RB), lambda i: (0, 0)),     # box bias   (resident)
        ],
        out_specs=(
            pl.BlockSpec((TM, Kp1), lambda i: (i, 0)),
            pl.BlockSpec((TM, RB), lambda i: (i, 0)),
        ),
        compiler_params=pltpu.CompilerParams(
            dimension_semantics=("parallel",),           # row tiles independent
            vmem_limit_bytes=vmem_limit,
        ),
        cost_estimate=cost,
    )(x, w_cls, b_cls, w_box, b_box)

    return scores, proposal_deltas


if __name__ == "__main__":
    # Module config (synthetic, deterministic):
    #   input_shape: channels=4, height=16, width=16 -> D = 4*16*16 = 1024
    #   num_classes = 7 -> cls_score out = 8
    #   cls_agnostic_bbox_reg = False, box_dim = 4 -> bbox_pred out = 7*4 = 28
    N, C, H, W = 2, 4, 16, 16
    D = C * H * W
    num_classes = 7
    box_dim = 4
    num_bbox_reg_classes = num_classes  # class-specific regression

    key = jax.random.PRNGKey(0)
    kx, kwc, kwb, kx2 = jax.random.split(key, 4)

    x = jax.random.normal(kx, (N, C, H, W), dtype=jnp.float32)

    # nn.init.normal_(cls_score.weight, std=0.01); bias = 0
    # (weights stored transposed (D, out) for the kernel)
    w_cls = 0.01 * jax.random.normal(kwc, (D, num_classes + 1), dtype=jnp.float32)
    b_cls = jnp.zeros((num_classes + 1,), dtype=jnp.float32)
    # nn.init.normal_(bbox_pred.weight, std=0.001); bias = 0
    w_box = 0.001 * jax.random.normal(
        kwb, (D, num_bbox_reg_classes * box_dim), dtype=jnp.float32)
    b_box = jnp.zeros((num_bbox_reg_classes * box_dim,), dtype=jnp.float32)

    # --- fp32 path: small shapes, exact-ish check against plain JAX --------
    params_f32 = prepare_fast_rcnn_params(w_cls, b_cls, w_box, b_box,
                                          weight_dtype=jnp.float32)
    scores, deltas = fast_rcnn_output_layers_forward(x, *params_f32)
    jax.block_until_ready((scores, deltas))

    x2d = x.reshape(N, -1)
    assert scores.shape == (N, num_classes + 1)
    assert deltas.shape == (N, num_bbox_reg_classes * box_dim)
    assert jnp.allclose(scores, x2d @ w_cls + b_cls, atol=1e-4, rtol=1e-4)
    assert jnp.allclose(deltas, x2d @ w_box + b_box, atol=1e-4, rtol=1e-4)

    # --- bf16 streaming path: realistic RoI count, multi-step grid with a
    # partial last tile (1000 = 7*128 + 104), params prepared once ----------
    N2 = 1000
    x2 = jax.random.normal(kx2, (N2, D), dtype=jnp.bfloat16)
    params_bf16 = prepare_fast_rcnn_params(w_cls, b_cls, w_box, b_box)  # once
    s2, d2 = fast_rcnn_output_layers_forward(x2, *params_bf16)
    jax.block_until_ready((s2, d2))

    x2f = x2.astype(jnp.float32)
    wcf = params_bf16[0].astype(jnp.float32)
    wbf = params_bf16[2].astype(jnp.float32)
    assert s2.shape == (N2, num_classes + 1)
    assert d2.shape == (N2, num_bbox_reg_classes * box_dim)
    assert jnp.allclose(s2, x2f @ wcf + b_cls, atol=1e-2, rtol=1e-2)
    assert jnp.allclose(d2, x2f @ wbf + b_box, atol=1e-2, rtol=1e-2)

    print("KERNEL_OK")
</pallas_src>

<mosaic_0001>
module attributes {stable_mosaic.version = 11 : i64} {
  func.func @_fast_rcnn_heads_kernel(%arg0: i32, %arg1: memref<8x1024xf32, #tpu.memory_space<vmem>>, %arg2: memref<1024x8xf32, #tpu.memory_space<vmem>>, %arg3: memref<1x8xf32, #tpu.memory_space<vmem>>, %arg4: memref<1024x28xf32, #tpu.memory_space<vmem>>, %arg5: memref<1x28xf32, #tpu.memory_space<vmem>>, %arg6: memref<8x8xf32, #tpu.memory_space<vmem>>, %arg7: memref<8x28xf32, #tpu.memory_space<vmem>>) attributes {dimension_semantics = [#tpu.dimension_semantics<parallel>], iteration_bounds = array<i64: 1>, scalar_prefetch = 0 : i64, scratch_operands = 0 : i64, tpu.core_type = #tpu.core_type<tc>, window_params = [{transform_indices = @transform_0, window_bounds = array<i64: 8, 1024>}, {pipeline_mode = #tpu.pipeline_mode<synchronous>, transform_indices = @transform_1, window_bounds = array<i64: 1024, 8>}, {pipeline_mode = #tpu.pipeline_mode<synchronous>, transform_indices = @transform_2, window_bounds = array<i64: 1, 8>}, {pipeline_mode = #tpu.pipeline_mode<synchronous>, transform_indices = @transform_3, window_bounds = array<i64: 1024, 28>}, {pipeline_mode = #tpu.pipeline_mode<synchronous>, transform_indices = @transform_4, window_bounds = array<i64: 1, 28>}, {transform_indices = @transform_5, window_bounds = array<i64: 8, 8>}, {transform_indices = @transform_6, window_bounds = array<i64: 8, 28>}]} {
    %c0 = arith.constant 0 : index
    %c0_0 = arith.constant 0 : index
    %0 = vector.load %arg1[%c0, %c0_0] : memref<8x1024xf32, #tpu.memory_space<vmem>>, vector<8x1024xf32>
    %c0_1 = arith.constant 0 : index
    %c0_2 = arith.constant 0 : index
    %1 = vector.load %arg2[%c0_1, %c0_2] : memref<1024x8xf32, #tpu.memory_space<vmem>>, vector<1024x8xf32>
    %cst = arith.constant dense<0.000000e+00> : vector<8x8xf32>
    %2 = tpu.matmul %0, %1, %cst {dimension_numbers = #tpu.dot_dimension_numbers<[1], [0], [0], [1], [0, 0, 1, 1], [], []>} : vector<8x1024xf32>, vector<1024x8xf32>, vector<8x8xf32> -> vector<8x8xf32>
    %c0_3 = arith.constant 0 : index
    %c0_4 = arith.constant 0 : index
    %3 = vector.load %arg3[%c0_3, %c0_4] : memref<1x8xf32, #tpu.memory_space<vmem>>, vector<1x8xf32>
    %4 = vector.broadcast %3 : vector<1x8xf32> to vector<8x8xf32>
    %5 = arith.addf %2, %4 : vector<8x8xf32>
    %c0_5 = arith.constant 0 : index
    %c0_6 = arith.constant 0 : index
    %6 = vector.load %arg6[%c0_5, %c0_6] : memref<8x8xf32, #tpu.memory_space<vmem>>, vector<8x8xf32>
    tpu.vector_store %arg6[%c0_5, %c0_6], %5 {strides = array<i32>} : memref<8x8xf32, #tpu.memory_space<vmem>>, vector<8x8xf32>,
    %c0_7 = arith.constant 0 : index
    %c0_8 = arith.constant 0 : index
    %7 = vector.load %arg4[%c0_7, %c0_8] : memref<1024x28xf32, #tpu.memory_space<vmem>>, vector<1024x28xf32>
    %cst_9 = arith.constant dense<0.000000e+00> : vector<8x28xf32>
    %8 = tpu.matmul %0, %7, %cst_9 {dimension_numbers = #tpu.dot_dimension_numbers<[1], [0], [0], [1], [0, 0, 1, 1], [], []>} : vector<8x1024xf32>, vector<1024x28xf32>, vector<8x28xf32> -> vector<8x28xf32>
    %c0_10 = arith.constant 0 : index
    %c0_11 = arith.constant 0 : index
    %9 = vector.load %arg5[%c0_10, %c0_11] : memref<1x28xf32, #tpu.memory_space<vmem>>, vector<1x28xf32>
    %10 = vector.broadcast %9 : vector<1x28xf32> to vector<8x28xf32>
    %11 = arith.addf %8, %10 : vector<8x28xf32>
    %c0_12 = arith.constant 0 : index
    %c0_13 = arith.constant 0 : index
    %12 = vector.load %arg7[%c0_12, %c0_13] : memref<8x28xf32, #tpu.memory_space<vmem>>, vector<8x28xf32>
    tpu.vector_store %arg7[%c0_12, %c0_13], %11 {strides = array<i32>} : memref<8x28xf32, #tpu.memory_space<vmem>>, vector<8x28xf32>,
    return
  }
  func.func @transform_0(%arg0: i32) -> (i32, i32) {
    %c0_i32 = arith.constant 0 : i32
    %c0_i32_0 = arith.constant 0 : i32
    return %arg0, %c0_i32 : i32, i32
  }
  func.func @transform_1(%arg0: i32) -> (i32, i32) {
    %c0_i32 = arith.constant 0 : i32
    %c0_i32_0 = arith.constant 0 : i32
    %c0_i32_1 = arith.constant 0 : i32
    return %c0_i32, %c0_i32_0 : i32, i32
  }
  func.func @transform_2(%arg0: i32) -> (i32, i32) {
    %c0_i32 = arith.constant 0 : i32
    %c0_i32_0 = arith.constant 0 : i32
    %c0_i32_1 = arith.constant 0 : i32
    return %c0_i32, %c0_i32_0 : i32, i32
  }
  func.func @transform_3(%arg0: i32) -> (i32, i32) {
    %c0_i32 = arith.constant 0 : i32
    %c0_i32_0 = arith.constant 0 : i32
    %c0_i32_1 = arith.constant 0 : i32
    return %c0_i32, %c0_i32_0 : i32, i32
  }
  func.func @transform_4(%arg0: i32) -> (i32, i32) {
    %c0_i32 = arith.constant 0 : i32
    %c0_i32_0 = arith.constant 0 : i32
    %c0_i32_1 = arith.constant 0 : i32
    return %c0_i32, %c0_i32_0 : i32, i32
  }
  func.func @transform_5(%arg0: i32) -> (i32, i32) {
    %c0_i32 = arith.constant 0 : i32
    %c0_i32_0 = arith.constant 0 : i32
    return %arg0, %c0_i32 : i32, i32
  }
  func.func @transform_6(%arg0: i32) -> (i32, i32) {
    %c0_i32 = arith.constant 0 : i32
    %c0_i32_0 = arith.constant 0 : i32
    return %arg0, %c0_i32 : i32, i32
  }
}

</mosaic_0001>

<llo_original>
// kernel: fast_rcnn_output_layers_forward.1
$region0: #{fast_rcnn_output_layers_forward.1}
  #allocation0 [shape = 'u32[]', space=smem, size = 0x4, offset = 0x4, fixed_abs, tag = 'smem constant byte address 0x4 - core index']
  #allocation1 [shape = 'u32[72,128]{1,0:T(1,128)}', space=vmem, size = 0x9000, scoped, tag = 'internal scratch']
  %s0 = inlined_call_operand.vmem [shape: f32[2,1024], index: 0, kind: input, shape index: {}]
  %s1 = inlined_call_operand.vmem [shape: f32[1024,8], index: 1, kind: input, shape index: {}]
  %s2 = inlined_call_operand.vmem [shape: f32[1,8], index: 2, kind: input, shape index: {}]
  %s3 = inlined_call_operand.vmem [shape: f32[1024,28], index: 3, kind: input, shape index: {}]
  %s4 = inlined_call_operand.vmem [shape: f32[1,28], index: 4, kind: input, shape index: {}]
  %s5 = inlined_call_operand.hbm [shape: f32[2,8], index: 5, kind: output, shape index: {0}]
  %s6 = inlined_call_operand.hbm [shape: f32[2,28], index: 6, kind: output, shape index: {1}]
  %7 = xla_tuple %s5, %s6
  %s8 = sld [smem:[#allocation0]]
  $region38: #{fast_rcnn_output_layers_forward.1} parent=0
    _
  %s10 = ssub.s32 1, %s8
  %s11 = scalar_select 0, %s10, %s8
  $region1: #{fast_rcnn_output_layers_forward.1} parent=0
    #allocation2 [shape = 'u8[4096]{0}', space=vmem, size = 0x1000, scoped, tag = 'output window, operand 0, single buffered']
    #allocation3 [shape = 's32[1]{0}', space=sflag, size = 0x4, scoped, tag = 'scoped memory for fast_rcnn_output_layers_forward.1']
    #allocation4 [shape = 'u8[4096]{0}', space=vmem, size = 0x1000, scoped, tag = 'output window, operand 1, single buffered']
    #allocation5 [shape = 's32[1]{0}', space=sflag, size = 0x4, scoped, tag = 'scoped memory for fast_rcnn_output_layers_forward.1']
    %12 = vsyncpa [#allocation3], 0
    %13 = vsyncpa [#allocation5], 0
    // Predicated region
    $region2: #{fast_rcnn_output_layers_forward.1} parent=1 // pred_check
      _
    $region3: #{fast_rcnn_output_layers_forward.1} parent=1 // pred_check_branch
      %15 = sbr.rel (0) target = $region5
    $region4: #{fast_rcnn_output_layers_forward.1} parent=1 // pred_region
      _
    $region5: #{fast_rcnn_output_layers_forward.1} parent=1 // pred_fallthru
      _
    // Predicated region
    $region6: #{fast_rcnn_output_layers_forward.1} parent=1 // pred_check
      _
    $region7: #{fast_rcnn_output_layers_forward.1} parent=1 // pred_check_branch
      %17 = sbr.rel (0) target = $region9
    $region8: #{fast_rcnn_output_layers_forward.1} parent=1 // pred_region
      _
    $region9: #{fast_rcnn_output_layers_forward.1} parent=1 // pred_fallthru
      _
    // Predicated region
    $region10: #{fast_rcnn_output_layers_forward.1} parent=1 // pred_check
      _
    $region11: #{fast_rcnn_output_layers_forward.1} parent=1 // pred_check_branch
      %19 = sbr.rel (0) target = $region13
    $region12: #{fast_rcnn_output_layers_forward.1} parent=1 // pred_region
      _
    $region13: #{fast_rcnn_output_layers_forward.1} parent=1 // pred_fallthru
      _
    // Predicated region
    $region14: #{fast_rcnn_output_layers_forward.1} parent=1 // pred_check
      _
    $region15: #{fast_rcnn_output_layers_forward.1} parent=1 // pred_check_branch
      %21 = sbr.rel (0) target = $region17
    $region16: #{fast_rcnn_output_layers_forward.1} parent=1 // pred_region
      _
    $region17: #{fast_rcnn_output_layers_forward.1} parent=1 // pred_fallthru
      _
    // Predicated region
    $region18: #{fast_rcnn_output_layers_forward.1} parent=1 // pred_check
      _
    $region19: #{fast_rcnn_output_layers_forward.1} parent=1 // pred_check_branch
      %23 = sbr.rel (0) target = $region21
    $region20: #{fast_rcnn_output_layers_forward.1} parent=1 // pred_region
      _
    $region21: #{fast_rcnn_output_layers_forward.1} parent=1 // pred_fallthru
      _
    %v24 = vld [vmem:[%s0] sm:$0xff]
    %v25 = vld [vmem:[%s0 + $0x8] sm:$0xff]
    %v26 = vld [vmem:[%s0 + $0x10] sm:$0xff]
    %v27 = vld [vmem:[%s0 + $0x18] sm:$0xff]
    %v28 = vld [vmem:[%s0 + $0x20] sm:$0xff]
    %v29 = vld [vmem:[%s0 + $0x28] sm:$0xff]
    %v30 = vld [vmem:[%s0 + $0x30] sm:$0xff]
    %v31 = vld [vmem:[%s0 + $0x38] sm:$0xff]
    %v32 = vld [vmem:[%s1] sm:$0xff]
    %v33 = vld [vmem:[%s1 + $0x8] sm:$0xff]
    %v34 = vld [vmem:[%s1 + $0x10] sm:$0xff]
    %v35 = vld [vmem:[%s1 + $0x18] sm:$0xff]
    %v36 = vld [vmem:[%s1 + $0x20] sm:$0xff]
    %v37 = vld [vmem:[%s1 + $0x28] sm:$0xff]
    %v38 = vld [vmem:[%s1 + $0x30] sm:$0xff]
    %v39 = vld [vmem:[%s1 + $0x38] sm:$0xff]
    %v40 = vld [vmem:[%s1 + $0x40] sm:$0xff]
    %v41 = vld [vmem:[%s1 + $0x48] sm:$0xff]
    %v42 = vld [vmem:[%s1 + $0x50] sm:$0xff]
    %v43 = vld [vmem:[%s1 + $0x58] sm:$0xff]
    %v44 = vld [vmem:[%s1 + $0x60] sm:$0xff]
    %v45 = vld [vmem:[%s1 + $0x68] sm:$0xff]
    %v46 = vld [vmem:[%s1 + $0x70] sm:$0xff]
    %v47 = vld [vmem:[%s1 + $0x78] sm:$0xff]
    %v48 = vld [vmem:[%s1 + $0x80] sm:$0xff]
    %v49 = vld [vmem:[%s1 + $0x88] sm:$0xff]
    %v50 = vld [vmem:[%s1 + $0x90] sm:$0xff]
    %v51 = vld [vmem:[%s1 + $0x98] sm:$0xff]
    %v52 = vld [vmem:[%s1 + $0xa0] sm:$0xff]
    %v53 = vld [vmem:[%s1 + $0xa8] sm:$0xff]
    %v54 = vld [vmem:[%s1 + $0xb0] sm:$0xff]
    %v55 = vld [vmem:[%s1 + $0xb8] sm:$0xff]
    %v56 = vld [vmem:[%s1 + $0xc0] sm:$0xff]
    %v57 = vld [vmem:[%s1 + $0xc8] sm:$0xff]
    %v58 = vld [vmem:[%s1 + $0xd0] sm:$0xff]
    %v59 = vld [vmem:[%s1 + $0xd8] sm:$0xff]
    %v60 = vld [vmem:[%s1 + $0xe0] sm:$0xff]
    %v61 = vld [vmem:[%s1 + $0xe8] sm:$0xff]
    %v62 = vld [vmem:[%s1 + $0xf0] sm:$0xff]
    %v63 = vld [vmem:[%s1 + $0xf8] sm:$0xff]
    %v64 = vld [vmem:[%s1 + $0x100] sm:$0xff]
    %v65 = vld [vmem:[%s1 + $0x108] sm:$0xff]
    %v66 = vld [vmem:[%s1 + $0x110] sm:$0xff]
    %v67 = vld [vmem:[%s1 + $0x118] sm:$0xff]
    %v68 = vld [vmem:[%s1 + $0x120] sm:$0xff]
    %v69 = vld [vmem:[%s1 + $0x128] sm:$0xff]
    %v70 = vld [vmem:[%s1 + $0x130] sm:$0xff]
    %v71 = vld [vmem:[%s1 + $0x138] sm:$0xff]
    %v72 = vld [vmem:[%s1 + $0x140] sm:$0xff]
    %v73 = vld [vmem:[%s1 + $0x148] sm:$0xff]
    %v74 = vld [vmem:[%s1 + $0x150] sm:$0xff]
    %v75 = vld [vmem:[%s1 + $0x158] sm:$0xff]
    %v76 = vld [vmem:[%s1 + $0x160] sm:$0xff]
    %v77 = vld [vmem:[%s1 + $0x168] sm:$0xff]
    %v78 = vld [vmem:[%s1 + $0x170] sm:$0xff]
    %v79 = vld [vmem:[%s1 + $0x178] sm:$0xff]
    %v80 = vld [vmem:[%s1 + $0x180] sm:$0xff]
    %v81 = vld [vmem:[%s1 + $0x188] sm:$0xff]
    %v82 = vld [vmem:[%s1 + $0x190] sm:$0xff]
    %v83 = vld [vmem:[%s1 + $0x198] sm:$0xff]
    %v84 = vld [vmem:[%s1 + $0x1a0] sm:$0xff]
    %v85 = vld [vmem:[%s1 + $0x1a8] sm:$0xff]
    %v86 = vld [vmem:[%s1 + $0x1b0] sm:$0xff]
    %v87 = vld [vmem:[%s1 + $0x1b8] sm:$0xff]
    %v88 = vld [vmem:[%s1 + $0x1c0] sm:$0xff]
    %v89 = vld [vmem:[%s1 + $0x1c8] sm:$0xff]
    %v90 = vld [vmem:[%s1 + $0x1d0] sm:$0xff]
    %v91 = vld [vmem:[%s1 + $0x1d8] sm:$0xff]
    %v92 = vld [vmem:[%s1 + $0x1e0] sm:$0xff]
    %v93 = vld [vmem:[%s1 + $0x1e8] sm:$0xff]
    %v94 = vld [vmem:[%s1 + $0x1f0] sm:$0xff]
    %v95 = vld [vmem:[%s1 + $0x1f8] sm:$0xff]
    %v96 = vld [vmem:[%s1 + $0x200] sm:$0xff]
    %v97 = vld [vmem:[%s1 + $0x208] sm:$0xff]
    %v98 = vld [vmem:[%s1 + $0x210] sm:$0xff]
    %v99 = vld [vmem:[%s1 + $0x218] sm:$0xff]
    %v100 = vld [vmem:[%s1 + $0x220] sm:$0xff]
    %v101 = vld [vmem:[%s1 + $0x228] sm:$0xff]
    %v102 = vld [vmem:[%s1 + $0x230] sm:$0xff]
    %v103 = vld [vmem:[%s1 + $0x238] sm:$0xff]
    %v104 = vld [vmem:[%s1 + $0x240] sm:$0xff]
    %v105 = vld [vmem:[%s1 + $0x248] sm:$0xff]
    %v106 = vld [vmem:[%s1 + $0x250] sm:$0xff]
    %v107 = vld [vmem:[%s1 + $0x258] sm:$0xff]
    %v108 = vld [vmem:[%s1 + $0x260] sm:$0xff]
    %v109 = vld [vmem:[%s1 + $0x268] sm:$0xff]
    %v110 = vld [vmem:[%s1 + $0x270] sm:$0xff]
    %v111 = vld [vmem:[%s1 + $0x278] sm:$0xff]
    %v112 = vld [vmem:[%s1 + $0x280] sm:$0xff]
    %v113 = vld [vmem:[%s1 + $0x288] sm:$0xff]
    %v114 = vld [vmem:[%s1 + $0x290] sm:$0xff]
    %v115 = vld [vmem:[%s1 + $0x298] sm:$0xff]
    %v116 = vld [vmem:[%s1 + $0x2a0] sm:$0xff]
    %v117 = vld [vmem:[%s1 + $0x2a8] sm:$0xff]
    %v118 = vld [vmem:[%s1 + $0x2b0] sm:$0xff]
    %v119 = vld [vmem:[%s1 + $0x2b8] sm:$0xff]
    %v120 = vld [vmem:[%s1 + $0x2c0] sm:$0xff]
    %v121 = vld [vmem:[%s1 + $0x2c8] sm:$0xff]
    %v122 = vld [vmem:[%s1 + $0x2d0] sm:$0xff]
    %v123 = vld [vmem:[%s1 + $0x2d8] sm:$0xff]
    %v124 = vld [vmem:[%s1 + $0x2e0] sm:$0xff]
    %v125 = vld [vmem:[%s1 + $0x2e8] sm:$0xff]
    %v126 = vld [vmem:[%s1 + $0x2f0] sm:$0xff]
    %v127 = vld [vmem:[%s1 + $0x2f8] sm:$0xff]
    %v128 = vld [vmem:[%s1 + $0x300] sm:$0xff]
    %v129 = vld [vmem:[%s1 + $0x308] sm:$0xff]
    %v130 = vld [vmem:[%s1 + $0x310] sm:$0xff]
    %v131 = vld [vmem:[%s1 + $0x318] sm:$0xff]
    %v132 = vld [vmem:[%s1 + $0x320] sm:$0xff]
    %v133 = vld [vmem:[%s1 + $0x328] sm:$0xff]
    %v134 = vld [vmem:[%s1 + $0x330] sm:$0xff]
    %v135 = vld [vmem:[%s1 + $0x338] sm:$0xff]
    %v136 = vld [vmem:[%s1 + $0x340] sm:$0xff]
    %v137 = vld [vmem:[%s1 + $0x348] sm:$0xff]
    %v138 = vld [vmem:[%s1 + $0x350] sm:$0xff]
    %v139 = vld [vmem:[%s1 + $0x358] sm:$0xff]
    %v140 = vld [vmem:[%s1 + $0x360] sm:$0xff]
    %v141 = vld [vmem:[%s1 + $0x368] sm:$0xff]
    %v142 = vld [vmem:[%s1 + $0x370] sm:$0xff]
    %v143 = vld [vmem:[%s1 + $0x378] sm:$0xff]
    %v144 = vld [vmem:[%s1 + $0x380] sm:$0xff]
    %v145 = vld [vmem:[%s1 + $0x388] sm:$0xff]
    %v146 = vld [vmem:[%s1 + $0x390] sm:$0xff]
    %v147 = vld [vmem:[%s1 + $0x398] sm:$0xff]
    %v148 = vld [vmem:[%s1 + $0x3a0] sm:$0xff]
    %v149 = vld [vmem:[%s1 + $0x3a8] sm:$0xff]
    %v150 = vld [vmem:[%s1 + $0x3b0] sm:$0xff]
    %v151 = vld [vmem:[%s1 + $0x3b8] sm:$0xff]
    %v152 = vld [vmem:[%s1 + $0x3c0] sm:$0xff]
    %v153 = vld [vmem:[%s1 + $0x3c8] sm:$0xff]
    %v154 = vld [vmem:[%s1 + $0x3d0] sm:$0xff]
    %v155 = vld [vmem:[%s1 + $0x3d8] sm:$0xff]
    %v156 = vld [vmem:[%s1 + $0x3e0] sm:$0xff]
    %v157 = vld [vmem:[%s1 + $0x3e8] sm:$0xff]
    %v158 = vld [vmem:[%s1 + $0x3f0] sm:$0xff]
    %v159 = vld [vmem:[%s1 + $0x3f8] sm:$0xff]
    %v160 = vld [vmem:[%s2] sm:$0x1]
    %v162 = vperm.slane %v160, 0
    %172 = vst [vmem:[#allocation1] ss:$4 sm:$0xff] %v24
    %s173 = scalar_lea.vmem [#allocation1], 1
    %174 = vst [vmem:[%s173] ss:$4 sm:$0xff] %v26
    %s175 = scalar_lea.vmem [#allocation1], 2
    %176 = vst [vmem:[%s175] ss:$4 sm:$0xff] %v28
    %s177 = scalar_lea.vmem [#allocation1], 3
    %178 = vst [vmem:[%s177] ss:$4 sm:$0xff] %v30
    %s179 = scalar_lea.vmem [#allocation1], 32
    %180 = vst [vmem:[%s179] ss:$4 sm:$0xff] %v25
    %s181 = scalar_lea.vmem [#allocation1], 33
    %182 = vst [vmem:[%s181] ss:$4 sm:$0xff] %v27
    %s183 = scalar_lea.vmem [#allocation1], 34
    %184 = vst [vmem:[%s183] ss:$4 sm:$0xff] %v29
    %s185 = scalar_lea.vmem [#allocation1], 35
    %186 = vst [vmem:[%s185] ss:$4 sm:$0xff] %v31
    %v187 = vld.sshfl [vmem:[#allocation1] sm:$0xff pattern:$0x73625140]
    %v188 = vld.sshfl [vmem:[#allocation1 + $0x8] sm:$0xff pattern:$0x73625140]
    %v189 = vld.sshfl [vmem:[#allocation1 + $0x10] sm:$0xff pattern:$0x73625140]
    %v190 = vld.sshfl [vmem:[#allocation1 + $0x18] sm:$0xff pattern:$0x73625140]
    %v191 = vld.sshfl [vmem:[#allocation1 + $0x20] sm:$0xff pattern:$0x73625140]
    %v192 = vld.sshfl [vmem:[#allocation1 + $0x28] sm:$0xff pattern:$0x73625140]
    %v193 = vld.sshfl [vmem:[#allocation1 + $0x30] sm:$0xff pattern:$0x73625140]
    %v194 = vld.sshfl [vmem:[#allocation1 + $0x38] sm:$0xff pattern:$0x73625140]
    %203 = vmatpush.msra.mxu0 %v47
    %204 = vmatpush.msra.mxu0 %v46
    %205 = vmatpush.msra.mxu0 %v45
    %206 = vmatpush.msra.mxu0 %v44
    %207 = vmatpush.msra.mxu0 %v43
    %208 = vmatpush.msra.mxu0 %v42
    %209 = vmatpush.msra.mxu0 %v41
    %210 = vmatpush.msra.mxu0 %v40
    %211 = vmatpush.msra.mxu0 %v39
    %212 = vmatpush.msra.mxu0 %v38
    %213 = vmatpush.msra.mxu0 %v37
    %214 = vmatpush.msra.mxu0 %v36
    %215 = vmatpush.msra.mxu0 %v35
    %216 = vmatpush.msra.mxu0 %v34
    %217 = vmatpush.msra.mxu0 %v33
    %218 = vmatpush.msra.mxu0 %v32
    %219 = vmatmul.f32.gmra.mxu0 %v187
    %v220 = vpop.f32.mrf.mxu0
    %v221 = vadd.f32 %v162, %v220
    %222 = vdwg.mxu0
    %223 = vmatpush.msra.mxu0 %v63
    %224 = vmatpush.msra.mxu0 %v62
    %225 = vmatpush.msra.mxu0 %v61
    %226 = vmatpush.msra.mxu0 %v60
    %227 = vmatpush.msra.mxu0 %v59
    %228 = vmatpush.msra.mxu0 %v58
    %229 = vmatpush.msra.mxu0 %v57
    %230 = vmatpush.msra.mxu0 %v56
    %231 = vmatpush.msra.mxu0 %v55
    %232 = vmatpush.msra.mxu0 %v54
    %233 = vmatpush.msra.mxu0 %v53
    %234 = vmatpush.msra.mxu0 %v52
    %235 = vmatpush.msra.mxu0 %v51
    %236 = vmatpush.msra.mxu0 %v50
    %237 = vmatpush.msra.mxu0 %v49
    %238 = vmatpush.msra.mxu0 %v48
    %239 = vmatmul.f32.gmra.mxu0 %v188
    %v240 = vpop.f32.mrf.mxu0
    %v241 = vadd.f32 %v221, %v240
    %242 = vdwg.mxu0
    %243 = vmatpush.msra.mxu0 %v79
    %244 = vmatpush.msra.mxu0 %v78
    %245 = vmatpush.msra.mxu0 %v77
    %246 = vmatpush.msra.mxu0 %v76
    %247 = vmatpush.msra.mxu0 %v75
    %248 = vmatpush.msra.mxu0 %v74
    %249 = vmatpush.msra.mxu0 %v73
    %250 = vmatpush.msra.mxu0 %v72
    %251 = vmatpush.msra.mxu0 %v71
    %252 = vmatpush.msra.mxu0 %v70
    %253 = vmatpush.msra.mxu0 %v69
    %254 = vmatpush.msra.mxu0 %v68
    %255 = vmatpush.msra.mxu0 %v67
    %256 = vmatpush.msra.mxu0 %v66
    %257 = vmatpush.msra.mxu0 %v65
    %258 = vmatpush.msra.mxu0 %v64
    %259 = vmatmul.f32.gmra.mxu0 %v189
    %v260 = vpop.f32.mrf.mxu0
    %v261 = vadd.f32 %v241, %v260
    %262 = vdwg.mxu0
    %263 = vmatpush.msra.mxu0 %v95
    %264 = vmatpush.msra.mxu0 %v94
    %265 = vmatpush.msra.mxu0 %v93
    %266 = vmatpush.msra.mxu0 %v92
    %267 = vmatpush.msra.mxu0 %v91
    %268 = vmatpush.msra.mxu0 %v90
    %269 = vmatpush.msra.mxu0 %v89
    %270 = vmatpush.msra.mxu0 %v88
    %271 = vmatpush.msra.mxu0 %v87
    %272 = vmatpush.msra.mxu0 %v86
    %273 = vmatpush.msra.mxu0 %v85
    %274 = vmatpush.msra.mxu0 %v84
    %275 = vmatpush.msra.mxu0 %v83
    %276 = vmatpush.msra.mxu0 %v82
    %277 = vmatpush.msra.mxu0 %v81
    %278 = vmatpush.msra.mxu0 %v80
    %279 = vmatmul.f32.gmra.mxu0 %v190
    %v280 = vpop.f32.mrf.mxu0
    %v281 = vadd.f32 %v261, %v280
    %282 = vdwg.mxu0
    %283 = vmatpush.msra.mxu0 %v111
    %284 = vmatpush.msra.mxu0 %v110
    %285 = vmatpush.msra.mxu0 %v109
    %286 = vmatpush.msra.mxu0 %v108
    %287 = vmatpush.msra.mxu0 %v107
    %288 = vmatpush.msra.mxu0 %v106
    %289 = vmatpush.msra.mxu0 %v105
    %290 = vmatpush.msra.mxu0 %v104
    %291 = vmatpush.msra.mxu0 %v103
    %292 = vmatpush.msra.mxu0 %v102
    %293 = vmatpush.msra.mxu0 %v101
    %294 = vmatpush.msra.mxu0 %v100
    %295 = vmatpush.msra.mxu0 %v99
    %296 = vmatpush.msra.mxu0 %v98
    %297 = vmatpush.msra.mxu0 %v97
    %298 = vmatpush.msra.mxu0 %v96
    %299 = vmatmul.f32.gmra.mxu0 %v191
    %v300 = vpop.f32.mrf.mxu0
    %v301 = vadd.f32 %v281, %v300
    %302 = vdwg.mxu0
    %303 = vmatpush.msra.mxu0 %v127
    %304 = vmatpush.msra.mxu0 %v126
    %305 = vmatpush.msra.mxu0 %v125
    %306 = vmatpush.msra.mxu0 %v124
    %307 = vmatpush.msra.mxu0 %v123
    %308 = vmatpush.msra.mxu0 %v122
    %309 = vmatpush.msra.mxu0 %v121
    %310 = vmatpush.msra.mxu0 %v120
    %311 = vmatpush.msra.mxu0 %v119
    %312 = vmatpush.msra.mxu0 %v118
    %313 = vmatpush.msra.mxu0 %v117
    %314 = vmatpush.msra.mxu0 %v116
    %315 = vmatpush.msra.mxu0 %v115
    %316 = vmatpush.msra.mxu0 %v114
    %317 = vmatpush.msra.mxu0 %v113
    %318 = vmatpush.msra.mxu0 %v112
    %319 = vmatmul.f32.gmra.mxu0 %v192
    %v320 = vpop.f32.mrf.mxu0
    %v321 = vadd.f32 %v301, %v320
    %322 = vdwg.mxu0
    %323 = vmatpush.msra.mxu0 %v143
    %324 = vmatpush.msra.mxu0 %v142
    %325 = vmatpush.msra.mxu0 %v141
    %326 = vmatpush.msra.mxu0 %v140
    %327 = vmatpush.msra.mxu0 %v139
    %328 = vmatpush.msra.mxu0 %v138
    %329 = vmatpush.msra.mxu0 %v137
    %330 = vmatpush.msra.mxu0 %v136
    %331 = vmatpush.msra.mxu0 %v135
    %332 = vmatpush.msra.mxu0 %v134
    %333 = vmatpush.msra.mxu0 %v133
    %334 = vmatpush.msra.mxu0 %v132
    %335 = vmatpush.msra.mxu0 %v131
    %336 = vmatpush.msra.mxu0 %v130
    %337 = vmatpush.msra.mxu0 %v129
    %338 = vmatpush.msra.mxu0 %v128
    %339 = vmatmul.f32.gmra.mxu0 %v193
    %v340 = vpop.f32.mrf.mxu0
    %v341 = vadd.f32 %v321, %v340
    %342 = vdwg.mxu0
    %343 = vmatpush.msra.mxu0 %v159
    %344 = vmatpush.msra.mxu0 %v158
    %345 = vmatpush.msra.mxu0 %v157
    %346 = vmatpush.msra.mxu0 %v156
    %347 = vmatpush.msra.mxu0 %v155
    %348 = vmatpush.msra.mxu0 %v154
    %349 = vmatpush.msra.mxu0 %v153
    %350 = vmatpush.msra.mxu0 %v152
    %351 = vmatpush.msra.mxu0 %v151
    %352 = vmatpush.msra.mxu0 %v150
    %353 = vmatpush.msra.mxu0 %v149
    %354 = vmatpush.msra.mxu0 %v148
    %355 = vmatpush.msra.mxu0 %v147
    %356 = vmatpush.msra.mxu0 %v146
    %357 = vmatpush.msra.mxu0 %v145
    %358 = vmatpush.msra.mxu0 %v144
    %359 = vmatmul.f32.gmra.mxu0 %v194
    %v360 = vpop.f32.mrf.mxu0
    %v361 = vadd.f32 %v341, %v360
    %362 = vdwg.mxu0
    %vm363 = vcmask 64512
    %364 = vst.msk [vmem:[#allocation2] sm:$0xff] %vm363, %v361
    %v365 = vld [vmem:[%s3] sm:$0xff]
    %v366 = vld [vmem:[%s3 + $0x8] sm:$0xff]
    %v367 = vld [vmem:[%s3 + $0x10] sm:$0xff]
    %v368 = vld [vmem:[%s3 + $0x18] sm:$0xff]
    %v369 = vld [vmem:[%s3 + $0x20] sm:$0xff]
    %v370 = vld [vmem:[%s3 + $0x28] sm:$0xff]
    %v371 = vld [vmem:[%s3 + $0x30] sm:$0xff]
    %v372 = vld [vmem:[%s3 + $0x38] sm:$0xff]
    %v373 = vld [vmem:[%s3 + $0x40] sm:$0xff]
    %v374 = vld [vmem:[%s3 + $0x48] sm:$0xff]
    %v375 = vld [vmem:[%s3 + $0x50] sm:$0xff]
    %v376 = vld [vmem:[%s3 + $0x58] sm:$0xff]
    %v377 = vld [vmem:[%s3 + $0x60] sm:$0xff]
    %v378 = vld [vmem:[%s3 + $0x68] sm:$0xff]
    %v379 = vld [vmem:[%s3 + $0x70] sm:$0xff]
    %v380 = vld [vmem:[%s3 + $0x78] sm:$0xff]
    %v381 = vld [vmem:[%s3 + $0x80] sm:$0xff]
    %v382 = vld [vmem:[%s3 + $0x88] sm:$0xff]
    %v383 = vld [vmem:[%s3 + $0x90] sm:$0xff]
    %v384 = vld [vmem:[%s3 + $0x98] sm:$0xff]
    %v385 = vld [vmem:[%s3 + $0xa0] sm:$0xff]
    %v386 = vld [vmem:[%s3 + $0xa8] sm:$0xff]
    %v387 = vld [vmem:[%s3 + $0xb0] sm:$0xff]
    %v388 = vld [vmem:[%s3 + $0xb8] sm:$0xff]
    %v389 = vld [vmem:[%s3 + $0xc0] sm:$0xff]
    %v390 = vld [vmem:[%s3 + $0xc8] sm:$0xff]
    %v391 = vld [vmem:[%s3 + $0xd0] sm:$0xff]
    %v392 = vld [vmem:[%s3 + $0xd8] sm:$0xff]
    %v393 = vld [vmem:[%s3 + $0xe0] sm:$0xff]
    %v394 = vld [vmem:[%s3 + $0xe8] sm:$0xff]
    %v395 = vld [vmem:[%s3 + $0xf0] sm:$0xff]
    %v396 = vld [vmem:[%s3 + $0xf8] sm:$0xff]
    %v397 = vld [vmem:[%s3 + $0x100] sm:$0xff]
    %v398 = vld [vmem:[%s3 + $0x108] sm:$0xff]
    %v399 = vld [vmem:[%s3 + $0x110] sm:$0xff]
    %v400 = vld [vmem:[%s3 + $0x118] sm:$0xff]
    %v401 = vld [vmem:[%s3 + $0x120] sm:$0xff]
    %v402 = vld [vmem:[%s3 + $0x128] sm:$0xff]
    %v403 = vld [vmem:[%s3 + $0x130] sm:$0xff]
    %v404 = vld [vmem:[%s3 + $0x138] sm:$0xff]
    %v405 = vld [vmem:[%s3 + $0x140] sm:$0xff]
    %v406 = vld [vmem:[%s3 + $0x148] sm:$0xff]
    %v407 = vld [vmem:[%s3 + $0x150] sm:$0xff]
    %v408 = vld [vmem:[%s3 + $0x158] sm:$0xff]
    %v409 = vld [vmem:[%s3 + $0x160] sm:$0xff]
    %v410 = vld [vmem:[%s3 + $0x168] sm:$0xff]
    %v411 = vld [vmem:[%s3 + $0x170] sm:$0xff]
    %v412 = vld [vmem:[%s3 + $0x178] sm:$0xff]
    %v413 = vld [vmem:[%s3 + $0x180] sm:$0xff]
    %v414 = vld [vmem:[%s3 + $0x188] sm:$0xff]
    %v415 = vld [vmem:[%s3 + $0x190] sm:$0xff]
    %v416 = vld [vmem:[%s3 + $0x198] sm:$0xff]
    %v417 = vld [vmem:[%s3 + $0x1a0] sm:$0xff]
    %v418 = vld [vmem:[%s3 + $0x1a8] sm:$0xff]
    %v419 = vld [vmem:[%s3 + $0x1b0] sm:$0xff]
    %v420 = vld [vmem:[%s3 + $0x1b8] sm:$0xff]
    %v421 = vld [vmem:[%s3 + $0x1c0] sm:$0xff]
    %v422 = vld [vmem:[%s3 + $0x1c8] sm:$0xff]
    %v423 = vld [vmem:[%s3 + $0x1d0] sm:$0xff]
    %v424 = vld [vmem:[%s3 + $0x1d8] sm:$0xff]
    %v425 = vld [vmem:[%s3 + $0x1e0] sm:$0xff]
    %v426 = vld [vmem:[%s3 + $0x1e8] sm:$0xff]
    %v427 = vld [vmem:[%s3 + $0x1f0] sm:$0xff]
    %v428 = vld [vmem:[%s3 + $0x1f8] sm:$0xff]
    %v429 = vld [vmem:[%s3 + $0x200] sm:$0xff]
    %v430 = vld [vmem:[%s3 + $0x208] sm:$0xff]
    %v431 = vld [vmem:[%s3 + $0x210] sm:$0xff]
    %v432 = vld [vmem:[%s3 + $0x218] sm:$0xff]
    %v433 = vld [vmem:[%s3 + $0x220] sm:$0xff]
    %v434 = vld [vmem:[%s3 + $0x228] sm:$0xff]
    %v435 = vld [vmem:[%s3 + $0x230] sm:$0xff]
    %v436 = vld [vmem:[%s3 + $0x238] sm:$0xff]
    %v437 = vld [vmem:[%s3 + $0x240] sm:$0xff]
    %v438 = vld [vmem:[%s3 + $0x248] sm:$0xff]
    %v439 = vld [vmem:[%s3 + $0x250] sm:$0xff]
    %v440 = vld [vmem:[%s3 + $0x258] sm:$0xff]
    %v441 = vld [vmem:[%s3 + $0x260] sm:$0xff]
    %v442 = vld [vmem:[%s3 + $0x268] sm:$0xff]
    %v443 = vld [vmem:[%s3 + $0x270] sm:$0xff]
    %v444 = vld [vmem:[%s3 + $0x278] sm:$0xff]
    %v445 = vld [vmem:[%s3 + $0x280] sm:$0xff]
    %v446 = vld [vmem:[%s3 + $0x288] sm:$0xff]
    %v447 = vld [vmem:[%s3 + $0x290] sm:$0xff]
    %v448 = vld [vmem:[%s3 + $0x298] sm:$0xff]
    %v449 = vld [vmem:[%s3 + $0x2a0] sm:$0xff]
    %v450 = vld [vmem:[%s3 + $0x2a8] sm:$0xff]
    %v451 = vld [vmem:[%s3 + $0x2b0] sm:$0xff]
    %v452 = vld [vmem:[%s3 + $0x2b8] sm:$0xff]
    %v453 = vld [vmem:[%s3 + $0x2c0] sm:$0xff]
    %v454 = vld [vmem:[%s3 + $0x2c8] sm:$0xff]
    %v455 = vld [vmem:[%s3 + $0x2d0] sm:$0xff]
    %v456 = vld [vmem:[%s3 + $0x2d8] sm:$0xff]
    %v457 = vld [vmem:[%s3 + $0x2e0] sm:$0xff]
    %v458 = vld [vmem:[%s3 + $0x2e8] sm:$0xff]
    %v459 = vld [vmem:[%s3 + $0x2f0] sm:$0xff]
    %v460 = vld [vmem:[%s3 + $0x2f8] sm:$0xff]
    %v461 = vld [vmem:[%s3 + $0x300] sm:$0xff]
    %v462 = vld [vmem:[%s3 + $0x308] sm:$0xff]
    %v463 = vld [vmem:[%s3 + $0x310] sm:$0xff]
    %v464 = vld [vmem:[%s3 + $0x318] sm:$0xff]
    %v465 = vld [vmem:[%s3 + $0x320] sm:$0xff]
    %v466 = vld [vmem:[%s3 + $0x328] sm:$0xff]
    %v467 = vld [vmem:[%s3 + $0x330] sm:$0xff]
    %v468 = vld [vmem:[%s3 + $0x338] sm:$0xff]
    %v469 = vld [vmem:[%s3 + $0x340] sm:$0xff]
    %v470 = vld [vmem:[%s3 + $0x348] sm:$0xff]
    %v471 = vld [vmem:[%s3 + $0x350] sm:$0xff]
    %v472 = vld [vmem:[%s3 + $0x358] sm:$0xff]
    %v473 = vld [vmem:[%s3 + $0x360] sm:$0xff]
    %v474 = vld [vmem:[%s3 + $0x368] sm:$0xff]
    %v475 = vld [vmem:[%s3 + $0x370] sm:$0xff]
    %v476 = vld [vmem:[%s3 + $0x378] sm:$0xff]
    %v477 = vld [vmem:[%s3 + $0x380] sm:$0xff]
    %v478 = vld [vmem:[%s3 + $0x388] sm:$0xff]
    %v479 = vld [vmem:[%s3 + $0x390] sm:$0xff]
    %v480 = vld [vmem:[%s3 + $0x398] sm:$0xff]
    %v481 = vld [vmem:[%s3 + $0x3a0] sm:$0xff]
    %v482 = vld [vmem:[%s3 + $0x3a8] sm:$0xff]
    %v483 = vld [vmem:[%s3 + $0x3b0] sm:$0xff]
    %v484 = vld [vmem:[%s3 + $0x3b8] sm:$0xff]
    %v485 = vld [vmem:[%s3 + $0x3c0] sm:$0xff]
    %v486 = vld [vmem:[%s3 + $0x3c8] sm:$0xff]
    %v487 = vld [vmem:[%s3 + $0x3d0] sm:$0xff]
    %v488 = vld [vmem:[%s3 + $0x3d8] sm:$0xff]
    %v489 = vld [vmem:[%s3 + $0x3e0] sm:$0xff]
    %v490 = vld [vmem:[%s3 + $0x3e8] sm:$0xff]
    %v491 = vld [vmem:[%s3 + $0x3f0] sm:$0xff]
    %v492 = vld [vmem:[%s3 + $0x3f8] sm:$0xff]
    %v493 = vld [vmem:[%s4] sm:$0x1]
    %v495 = vperm.slane %v493, 0
    %497 = vst [vmem:[#allocation1] ss:$4 sm:$0xff] %v24
    %s498 = scalar_lea.vmem [#allocation1], 1
    %499 = vst [vmem:[%s498] ss:$4 sm:$0xff] %v26
    %s500 = scalar_lea.vmem [#allocation1], 2
    %501 = vst [vmem:[%s500] ss:$4 sm:$0xff] %v28
    %s502 = scalar_lea.vmem [#allocation1], 3
    %503 = vst [vmem:[%s502] ss:$4 sm:$0xff] %v30
    %s504 = scalar_lea.vmem [#allocation1], 32
    %505 = vst [vmem:[%s504] ss:$4 sm:$0xff] %v25
    %s506 = scalar_lea.vmem [#allocation1], 33
    %507 = vst [vmem:[%s506] ss:$4 sm:$0xff] %v27
    %s508 = scalar_lea.vmem [#allocation1], 34
    %509 = vst [vmem:[%s508] ss:$4 sm:$0xff] %v29
    %s510 = scalar_lea.vmem [#allocation1], 35
    %511 = vst [vmem:[%s510] ss:$4 sm:$0xff] %v31
    %v512 = vld.sshfl [vmem:[#allocation1] sm:$0xff pattern:$0x73625140]
    %v513 = vld.sshfl [vmem:[#allocation1 + $0x8] sm:$0xff pattern:$0x73625140]
    %v514 = vld.sshfl [vmem:[#allocation1 + $0x10] sm:$0xff pattern:$0x73625140]
    %v515 = vld.sshfl [vmem:[#allocation1 + $0x18] sm:$0xff pattern:$0x73625140]
    %v516 = vld.sshfl [vmem:[#allocation1 + $0x20] sm:$0xff pattern:$0x73625140]
    %v517 = vld.sshfl [vmem:[#allocation1 + $0x28] sm:$0xff pattern:$0x73625140]
    %v518 = vld.sshfl [vmem:[#allocation1 + $0x30] sm:$0xff pattern:$0x73625140]
    %v519 = vld.sshfl [vmem:[#allocation1 + $0x38] sm:$0xff pattern:$0x73625140]
    %528 = vmatpush.msra.mxu0 %v380
    %529 = vmatpush.msra.mxu0 %v379
    %530 = vmatpush.msra.mxu0 %v378
    %531 = vmatpush.msra.mxu0 %v377
    %532 = vmatpush.msra.mxu0 %v376
    %533 = vmatpush.msra.mxu0 %v375
    %534 = vmatpush.msra.mxu0 %v374
    %535 = vmatpush.msra.mxu0 %v373
    %536 = vmatpush.msra.mxu0 %v372
    %537 = vmatpush.msra.mxu0 %v371
    %538 = vmatpush.msra.mxu0 %v370
    %539 = vmatpush.msra.mxu0 %v369
    %540 = vmatpush.msra.mxu0 %v368
    %541 = vmatpush.msra.mxu0 %v367
    %542 = vmatpush.msra.mxu0 %v366
    %543 = vmatpush.msra.mxu0 %v365
    %544 = vmatmul.f32.gmra.mxu0 %v512
    %v545 = vpop.f32.mrf.mxu0
    %v546 = vadd.f32 %v495, %v545
    %547 = vdwg.mxu0
    %548 = vmatpush.msra.mxu0 %v396
    %549 = vmatpush.msra.mxu0 %v395
    %550 = vmatpush.msra.mxu0 %v394
    %551 = vmatpush.msra.mxu0 %v393
    %552 = vmatpush.msra.mxu0 %v392
    %553 = vmatpush.msra.mxu0 %v391
    %554 = vmatpush.msra.mxu0 %v390
    %555 = vmatpush.msra.mxu0 %v389
    %556 = vmatpush.msra.mxu0 %v388
    %557 = vmatpush.msra.mxu0 %v387
    %558 = vmatpush.msra.mxu0 %v386
    %559 = vmatpush.msra.mxu0 %v385
    %560 = vmatpush.msra.mxu0 %v384
    %561 = vmatpush.msra.mxu0 %v383
    %562 = vmatpush.msra.mxu0 %v382
    %563 = vmatpush.msra.mxu0 %v381
    %564 = vmatmul.f32.gmra.mxu0 %v513
    %v565 = vpop.f32.mrf.mxu0
    %v566 = vadd.f32 %v546, %v565
    %567 = vdwg.mxu0
    %568 = vmatpush.msra.mxu0 %v412
    %569 = vmatpush.msra.mxu0 %v411
    %570 = vmatpush.msra.mxu0 %v410
    %571 = vmatpush.msra.mxu0 %v409
    %572 = vmatpush.msra.mxu0 %v408
    %573 = vmatpush.msra.mxu0 %v407
    %574 = vmatpush.msra.mxu0 %v406
    %575 = vmatpush.msra.mxu0 %v405
    %576 = vmatpush.msra.mxu0 %v404
    %577 = vmatpush.msra.mxu0 %v403
    %578 = vmatpush.msra.mxu0 %v402
    %579 = vmatpush.msra.mxu0 %v401
    %580 = vmatpush.msra.mxu0 %v400
    %581 = vmatpush.msra.mxu0 %v399
    %582 = vmatpush.msra.mxu0 %v398
    %583 = vmatpush.msra.mxu0 %v397
    %584 = vmatmul.f32.gmra.mxu0 %v514
    %v585 = vpop.f32.mrf.mxu0
    %v586 = vadd.f32 %v566, %v585
    %587 = vdwg.mxu0
    %588 = vmatpush.msra.mxu0 %v428
    %589 = vmatpush.msra.mxu0 %v427
    %590 = vmatpush.msra.mxu0 %v426
    %591 = vmatpush.msra.mxu0 %v425
    %592 = vmatpush.msra.mxu0 %v424
    %593 = vmatpush.msra.mxu0 %v423
    %594 = vmatpush.msra.mxu0 %v422
    %595 = vmatpush.msra.mxu0 %v421
    %596 = vmatpush.msra.mxu0 %v420
    %597 = vmatpush.msra.mxu0 %v419
    %598 = vmatpush.msra.mxu0 %v418
    %599 = vmatpush.msra.mxu0 %v417
    %600 = vmatpush.msra.mxu0 %v416
    %601 = vmatpush.msra.mxu0 %v415
    %602 = vmatpush.msra.mxu0 %v414
    %603 = vmatpush.msra.mxu0 %v413
    %604 = vmatmul.f32.gmra.mxu0 %v515
    %v605 = vpop.f32.mrf.mxu0
    %v606 = vadd.f32 %v586, %v605
    %607 = vdwg.mxu0
    %608 = vmatpush.msra.mxu0 %v444
    %609 = vmatpush.msra.mxu0 %v443
    %610 = vmatpush.msra.mxu0 %v442
    %611 = vmatpush.msra.mxu0 %v441
    %612 = vmatpush.msra.mxu0 %v440
    %613 = vmatpush.msra.mxu0 %v439
    %614 = vmatpush.msra.mxu0 %v438
    %615 = vmatpush.msra.mxu0 %v437
    %616 = vmatpush.msra.mxu0 %v436
    %617 = vmatpush.msra.mxu0 %v435
    %618 = vmatpush.msra.mxu0 %v434
    %619 = vmatpush.msra.mxu0 %v433
    %620 = vmatpush.msra.mxu0 %v432
    %621 = vmatpush.msra.mxu0 %v431
    %622 = vmatpush.msra.mxu0 %v430
    %623 = vmatpush.msra.mxu0 %v429
    %624 = vmatmul.f32.gmra.mxu0 %v516
    %v625 = vpop.f32.mrf.mxu0
    %v626 = vadd.f32 %v606, %v625
    %627 = vdwg.mxu0
    %628 = vmatpush.msra.mxu0 %v460
    %629 = vmatpush.msra.mxu0 %v459
    %630 = vmatpush.msra.mxu0 %v458
    %631 = vmatpush.msra.mxu0 %v457
    %632 = vmatpush.msra.mxu0 %v456
    %633 = vmatpush.msra.mxu0 %v455
    %634 = vmatpush.msra.mxu0 %v454
    %635 = vmatpush.msra.mxu0 %v453
    %636 = vmatpush.msra.mxu0 %v452
    %637 = vmatpush.msra.mxu0 %v451
    %638 = vmatpush.msra.mxu0 %v450
    %639 = vmatpush.msra.mxu0 %v449
    %640 = vmatpush.msra.mxu0 %v448
    %641 = vmatpush.msra.mxu0 %v447
    %642 = vmatpush.msra.mxu0 %v446
    %643 = vmatpush.msra.mxu0 %v445
    %644 = vmatmul.f32.gmra.mxu0 %v517
    %v645 = vpop.f32.mrf.mxu0
    %v646 = vadd.f32 %v626, %v645
    %647 = vdwg.mxu0
    %648 = vmatpush.msra.mxu0 %v476
    %649 = vmatpush.msra.mxu0 %v475
    %650 = vmatpush.msra.mxu0 %v474
    %651 = vmatpush.msra.mxu0 %v473
    %652 = vmatpush.msra.mxu0 %v472
    %653 = vmatpush.msra.mxu0 %v471
    %654 = vmatpush.msra.mxu0 %v470
    %655 = vmatpush.msra.mxu0 %v469
    %656 = vmatpush.msra.mxu0 %v468
    %657 = vmatpush.msra.mxu0 %v467
    %658 = vmatpush.msra.mxu0 %v466
    %659 = vmatpush.msra.mxu0 %v465
    %660 = vmatpush.msra.mxu0 %v464
    %661 = vmatpush.msra.mxu0 %v463
    %662 = vmatpush.msra.mxu0 %v462
    %663 = vmatpush.msra.mxu0 %v461
    %664 = vmatmul.f32.gmra.mxu0 %v518
    %v665 = vpop.f32.mrf.mxu0
    %v666 = vadd.f32 %v646, %v665
    %667 = vdwg.mxu0
    %668 = vmatpush.msra.mxu0 %v492
    %669 = vmatpush.msra.mxu0 %v491
    %670 = vmatpush.msra.mxu0 %v490
    %671 = vmatpush.msra.mxu0 %v489
    %672 = vmatpush.msra.mxu0 %v488
    %673 = vmatpush.msra.mxu0 %v487
    %674 = vmatpush.msra.mxu0 %v486
    %675 = vmatpush.msra.mxu0 %v485
    %676 = vmatpush.msra.mxu0 %v484
    %677 = vmatpush.msra.mxu0 %v483
    %678 = vmatpush.msra.mxu0 %v482
    %679 = vmatpush.msra.mxu0 %v481
    %680 = vmatpush.msra.mxu0 %v480
    %681 = vmatpush.msra.mxu0 %v479
    %682 = vmatpush.msra.mxu0 %v478
    %683 = vmatpush.msra.mxu0 %v477
    %684 = vmatmul.f32.gmra.mxu0 %v519
    %v685 = vpop.f32.mrf.mxu0
    %v686 = vadd.f32 %v666, %v685
    %687 = vdwg.mxu0
    %vm688 = vcmask 228352
    %689 = vst.msk [vmem:[#allocation4] sm:$0xff] %vm688, %v686
    // Predicated region
    $region22: #{fast_rcnn_output_layers_forward.1} parent=1 // pred_check
      _
    $region23: #{fast_rcnn_output_layers_forward.1} parent=1 // pred_check_branch
      %691 = sbr.rel (0) target = $region25
    $region24: #{fast_rcnn_output_layers_forward.1} parent=1 // pred_region
      %693 = vsyncadd [#allocation3], 96
      %s694 = sshll.u32 [#allocation2], 4
      %s695 = int_to_ptr.vmem [resolvable:$true] %s694
      %s696 = sshll.u32 %s5, 4
      %s697 = int_to_ptr.hbm [resolvable:$true] %s696
      %702 = dma.vmem_to_hbm [thread:$0]  %s695, 32, %s697, [#allocation3], 32, 32, 2
    $region25: #{fast_rcnn_output_layers_forward.1} parent=1 // pred_fallthru
      _
    // Predicated region
    $region26: #{fast_rcnn_output_layers_forward.1} parent=1 // pred_check
      _
    $region27: #{fast_rcnn_output_layers_forward.1} parent=1 // pred_check_branch
      %704 = sbr.rel (0) target = $region29
    $region28: #{fast_rcnn_output_layers_forward.1} parent=1 // pred_region
      %706 = vsyncadd [#allocation5], 96
      %s707 = sshll.u32 [#allocation4], 4
      %s708 = int_to_ptr.vmem [resolvable:$true] %s707
      %s709 = sshll.u32 %s6, 4
      %s710 = int_to_ptr.hbm [resolvable:$true] %s709
      %715 = dma.vmem_to_hbm [thread:$0]  %s708, 32, %s710, [#allocation5], 32, 32, 2
    $region29: #{fast_rcnn_output_layers_forward.1} parent=1 // pred_fallthru
      _
    // Predicated region
    $region30: #{fast_rcnn_output_layers_forward.1} parent=1 // pred_check
      _
    $region31: #{fast_rcnn_output_layers_forward.1} parent=1 // pred_check_branch
      %717 = sbr.rel (0) target = $region33
    $region32: #{fast_rcnn_output_layers_forward.1} parent=1 // pred_region
      %719 = dma.done [#allocation3], 128
    $region33: #{fast_rcnn_output_layers_forward.1} parent=1 // pred_fallthru
      _
    // Predicated region
    $region34: #{fast_rcnn_output_layers_forward.1} parent=1 // pred_check
      _
    $region35: #{fast_rcnn_output_layers_forward.1} parent=1 // pred_check_branch
      %721 = sbr.rel (0) target = $region37
    $region36: #{fast_rcnn_output_layers_forward.1} parent=1 // pred_region
      %723 = dma.done [#allocation5], 128
    $region37: #{fast_rcnn_output_layers_forward.1} parent=1 // pred_fallthru
      _
    %724 = vsyncpa [#allocation3], 1
    %725 = vsyncpa [#allocation5], 1

</llo_original>
